<compile_context>
chip_gen: v5e
topology: v5e:2x2
jax: 0.10.0
libtpu: 0.0.40
codegen_flags: <defaults>
</compile_context>

<pallas_src>
import functools

import jax
import jax.numpy as jnp
from jax.experimental import pallas as pl
from jax.experimental.pallas import tpu as pltpu


def _round_up(x, m):
    return ((x + m - 1) // m) * m


def _tensorcores_per_device():
    """Best-effort detection of multi-TensorCore ('megacore') devices.

    v5e / v6e expose 1 TensorCore per JAX device; v7x exposes 2.  Only on the
    latter is it worth splitting the (independent) batch axis across cores.
    """
    try:
        kind = jax.devices()[0].device_kind.lower()
    except Exception:
        return 1
    return 2 if ("v7" in kind or "tpu7" in kind) else 1


def rnn_recurrent_kernel(p_ref, whh_t_ref, h0_ref, out_ref, h_scratch, *,
                         seq_len, unroll):
    # p_ref:     (Tc, Bc, Hp)  time chunk of x @ W_ih^T + bias (compute dtype)
    # whh_t_ref: (Hp, Hp)      W_hh^T                          (compute dtype)
    # h0_ref:    (Bc, Hp)      initial hidden state (f32)
    # out_ref:   (Bc, Hp)      final hidden state h_T (written on last chunk)
    # h_scratch: (Bc, Hp) f32  hidden-state carry across time chunks
    c = pl.program_id(1)

    @pl.when(c == 0)
    def _():
        h_scratch[...] = h0_ref[...].astype(jnp.float32)

    tc = p_ref.shape[0]
    t0 = c * tc
    needs_mask = (seq_len % tc) != 0  # only the last chunk can have padded steps

    def step(tau, h):
        # W_hh^T is read at the dot site (not hoisted into vregs): at large Hp
        # a hoisted f32 load would occupy the entire register file and spill on
        # the serial critical path.
        pre = p_ref[tau].astype(jnp.float32) + jnp.dot(
            h.astype(whh_t_ref.dtype), whh_t_ref[...],
            preferred_element_type=jnp.float32)
        h_new = jnp.tanh(pre)
        if needs_mask:
            # Padded tail steps must not update h (tanh(0 + h@W) != h).
            h_new = jnp.where(t0 + tau < seq_len, h_new, h)
        return h_new

    # Bounded unroll: steps are serially dependent, so unrolling past a few
    # iterations adds no MXU/EUP overlap, only code size / vreg pressure.
    h = jax.lax.fori_loop(0, tc, step, h_scratch[...],
                          unroll=max(1, min(unroll, tc)))
    h_scratch[...] = h

    @pl.when(c == pl.num_programs(1) - 1)
    def _():
        out_ref[...] = h.astype(out_ref.dtype)


def rnn_forward(x, w_ih, w_hh, b_ih, b_hh, h0, *, tc_max=64, unroll=8,
                compute_dtype=jnp.bfloat16):
    """x: [B, T, D_in], w_ih: [H, D_in], w_hh: [H, H], b_*: [H], h0: [B, H].

    Returns h_T == output[:, -1, :], shape [B, H].
    `compute_dtype` controls the MXU-operand / P-stream dtype (bf16 default);
    the hidden-state carry, accumulation, and tanh stay f32.  Note: with bf16
    operands, rounding drift vs. an f32 reference grows slowly with T.
    """
    B, T, D = x.shape
    H = w_ih.shape[0]
    out_dtype = x.dtype
    cdt = jnp.dtype(compute_dtype)

    # --- Hardware granules: batch -> sublane (8), hidden -> lane (128). Only
    #     split the (independent) batch axis on multi-TensorCore chips (v7x);
    #     on v5e/v6e the split is pure grid overhead.
    Bp = _round_up(B, 8)
    Hp = _round_up(H, 128)
    n_tc = _tensorcores_per_device()
    if n_tc >= 2 and Bp >= 16:
        Bp = _round_up(Bp, 16)
        bc = Bp // 2
        core_split = True
    else:
        bc = Bp
        core_split = False
    n_bblk = Bp // bc

    # --- Time chunking: fixed chunk + cdiv (no divisor search); padded tail
    #     steps are masked inside the kernel.
    tc = min(T, tc_max)
    n_chunks = pl.cdiv(T, tc)
    Tp = n_chunks * tc

    # --- Hoisted, T-parallel input projection, produced directly as
    #     [T, Bp, Hp] with bias folded in.  Padding is fused into the small
    #     operands so no extra HBM round trip of the largest tensor occurs.
    x_p = jnp.pad(x, ((0, Bp - B), (0, 0), (0, 0)))
    w_ih_p = jnp.pad(w_ih, ((0, Hp - H), (0, 0)))
    bias_p = jnp.pad((b_ih + b_hh).astype(jnp.float32), (0, Hp - H))
    if cdt == jnp.dtype(jnp.bfloat16):
        proj = jnp.einsum("btd,hd->tbh",
                          x_p.astype(jnp.bfloat16), w_ih_p.astype(jnp.bfloat16),
                          preferred_element_type=jnp.float32) + bias_p
    else:
        proj = jnp.einsum("btd,hd->tbh",
                          x_p.astype(jnp.float32), w_ih_p.astype(jnp.float32),
                          precision=jax.lax.Precision.HIGHEST) + bias_p
    proj = proj.astype(cdt)  # P is the only per-step HBM stream
    if Tp > T:
        proj = jnp.pad(proj, ((0, Tp - T), (0, 0), (0, 0)))

    whh_t_p = jnp.pad(jnp.transpose(w_hh, (1, 0)).astype(jnp.float32),
                      ((0, Hp - H), (0, Hp - H))).astype(cdt)
    h0_p = jnp.pad(h0.astype(jnp.float32), ((0, Bp - B), (0, Hp - H)))

    # --- Specs. W_hh^T's block index never changes, so double-buffering it is
    #     VMEM waste; request a single buffer once it is big enough to matter.
    weight_bytes = Hp * Hp * cdt.itemsize
    if 2 * weight_bytes > (4 << 20):
        w_spec = pl.BlockSpec((Hp, Hp), lambda b, c: (0, 0),
                              pipeline_mode=pl.Buffered(1))
    else:
        w_spec = pl.BlockSpec((Hp, Hp), lambda b, c: (0, 0))

    p_chunk_bytes = tc * bc * Hp * cdt.itemsize
    vmem_est = (2 * p_chunk_bytes            # double-buffered P chunk
                + 2 * weight_bytes           # weight (upper bound: 2 buffers)
                + 5 * bc * Hp * 4)           # h0/out buffers + f32 scratch
    compiler_kwargs = {}
    if vmem_est > (32 << 20):
        compiler_kwargs["vmem_limit_bytes"] = int(min(vmem_est + (8 << 20),
                                                      64 << 20))

    if core_split:
        # Actually shard the independent batch blocks across v7x's two
        # TensorCores; plain "parallel" is a codegen no-op.
        dim_sem = (pltpu.CORE_PARALLEL, pltpu.ARBITRARY)
        # NOTE: a contiguous per-core P slab ([n_bblk, T, bc, Hp]) would give
        # simpler DMA descriptors here; the strided slice is kept for layout
        # simplicity.
    else:
        dim_sem = ("arbitrary", "arbitrary")

    kernel = functools.partial(rnn_recurrent_kernel, seq_len=T, unroll=unroll)

    out_p = pl.pallas_call(
        kernel,
        out_shape=jax.ShapeDtypeStruct((Bp, Hp), out_dtype),
        grid_spec=pltpu.PrefetchScalarGridSpec(
            num_scalar_prefetch=0,
            grid=(n_bblk, n_chunks),
            in_specs=[
                pl.BlockSpec((tc, bc, Hp), lambda b, c: (c, b, 0)),  # P chunk
                w_spec,                                              # W_hh^T
                pl.BlockSpec((bc, Hp), lambda b, c: (b, 0)),         # h0
            ],
            out_specs=pl.BlockSpec((bc, Hp), lambda b, c: (b, 0)),   # h_T
            scratch_shapes=[pltpu.VMEM((bc, Hp), jnp.float32)],
        ),
        compiler_params=pltpu.CompilerParams(
            dimension_semantics=dim_sem, **compiler_kwargs),
    )(proj, whh_t_p, h0_p)

    return out_p[:B, :H]


def rnn_reference(x, w_ih, w_hh, b_ih, b_hh, h0):
    """Pure-JAX reference of torch.nn.RNN (1 layer, tanh, batch_first)."""
    prec = jax.lax.Precision.HIGHEST

    def step(h, x_t):
        pre = (jnp.dot(x_t, w_ih.T, precision=prec) + b_ih
               + jnp.dot(h, w_hh.T, precision=prec) + b_hh)
        return jnp.tanh(pre), None

    x_tm = jnp.transpose(x, (1, 0, 2))  # [T, B, D]
    h_last, _ = jax.lax.scan(step, h0.astype(jnp.float32), x_tm)
    return h_last.astype(x.dtype)


if __name__ == "__main__":
    B, T, D_in, H = 2, 8, 16, 32

    key = jax.random.PRNGKey(0)
    kx, kwih, kwhh, kbih, kbhh, kh0 = jax.random.split(key, 6)

    # Deterministic parameter init, matching nn.RNN's U(-1/sqrt(H), 1/sqrt(H)).
    bound = 1.0 / jnp.sqrt(jnp.float32(H))
    x = jax.random.normal(kx, (B, T, D_in), dtype=jnp.float32)
    w_ih = jax.random.uniform(kwih, (H, D_in), minval=-bound, maxval=bound,
                              dtype=jnp.float32)
    w_hh = jax.random.uniform(kwhh, (H, H), minval=-bound, maxval=bound,
                              dtype=jnp.float32)
    b_ih = jax.random.uniform(kbih, (H,), minval=-bound, maxval=bound,
                              dtype=jnp.float32)
    b_hh = jax.random.uniform(kbhh, (H,), minval=-bound, maxval=bound,
                              dtype=jnp.float32)
    # The PyTorch forward draws h0 = torch.randn(...) at call time; we draw it
    # deterministically here instead.
    h0 = jax.random.normal(kh0, (B, H), dtype=jnp.float32)

    ref = rnn_reference(x, w_ih, w_hh, b_ih, b_hh, h0)

    # f32 MXU-operand path: tight check against the f32 reference.
    out_f32 = jax.block_until_ready(
        rnn_forward(x, w_ih, w_hh, b_ih, b_hh, h0, compute_dtype=jnp.float32))
    assert out_f32.shape == (B, H)
    assert jnp.allclose(out_f32, ref, atol=1e-5, rtol=1e-5), \
        "f32 mismatch vs reference"

    # Default path (bf16 MXU operands + bf16 P stream, f32 carry): loose
    # sanity bound — bf16 operand rounding drifts slowly over T.
    out_bf16 = jax.block_until_ready(
        rnn_forward(x, w_ih, w_hh, b_ih, b_hh, h0))
    assert out_bf16.shape == (B, H)
    assert float(jnp.max(jnp.abs(out_bf16 - ref))) < 0.1, \
        "bf16 drift vs reference"

    print("KERNEL_OK")
</pallas_src>

<mosaic_0001>
module attributes {stable_mosaic.version = 11 : i64} {
  func.func @rnn_recurrent_kernel(%arg0: i32, %arg1: i32, %arg2: memref<8x8x128xf32, #tpu.memory_space<vmem>>, %arg3: memref<128x128xf32, #tpu.memory_space<vmem>>, %arg4: memref<8x128xf32, #tpu.memory_space<vmem>>, %arg5: memref<8x128xf32, #tpu.memory_space<vmem>>, %arg6: memref<8x128xf32, #tpu.memory_space<vmem>>) attributes {dimension_semantics = [#tpu.dimension_semantics<arbitrary>, #tpu.dimension_semantics<arbitrary>], iteration_bounds = array<i64: 1, 1>, scalar_prefetch = 0 : i64, scratch_operands = 1 : i64, tpu.core_type = #tpu.core_type<tc>, window_params = [{transform_indices = @transform_0, window_bounds = array<i64: 8, 8, 128>}, {pipeline_mode = #tpu.pipeline_mode<synchronous>, transform_indices = @transform_1, window_bounds = array<i64: 128, 128>}, {transform_indices = @transform_2, window_bounds = array<i64: 8, 128>}, {transform_indices = @transform_3, window_bounds = array<i64: 8, 128>}]} {
    %c0_i32 = arith.constant 0 : i32
    %0 = arith.cmpi eq, %arg1, %c0_i32 : i32
    %1 = arith.extui %0 : i1 to i32
    %c0_i32_0 = arith.constant 0 : i32
    %2 = arith.cmpi ne, %1, %c0_i32_0 : i32
    scf.if %2 {
      %c0_46 = arith.constant 0 : index
      %c0_47 = arith.constant 0 : index
      %64 = vector.load %arg4[%c0_46, %c0_47] : memref<8x128xf32, #tpu.memory_space<vmem>>, vector<8x128xf32>
      %c0_48 = arith.constant 0 : index
      %c0_49 = arith.constant 0 : index
      %65 = vector.load %arg6[%c0_48, %c0_49] : memref<8x128xf32, #tpu.memory_space<vmem>>, vector<8x128xf32>
      tpu.vector_store %arg6[%c0_48, %c0_49], %64 {strides = array<i32>} : memref<8x128xf32, #tpu.memory_space<vmem>>, vector<8x128xf32>,
    } else {
    }
    %c0 = arith.constant 0 : index
    %c0_1 = arith.constant 0 : index
    %3 = vector.load %arg6[%c0, %c0_1] : memref<8x128xf32, #tpu.memory_space<vmem>>, vector<8x128xf32>
    %c0_i32_2 = arith.constant 0 : i32
    %4 = arith.index_cast %c0_i32_2 : i32 to index
    %c0_3 = arith.constant 0 : index
    %c0_4 = arith.constant 0 : index
    %5 = vector.load %arg2[%4, %c0_3, %c0_4] : memref<8x8x128xf32, #tpu.memory_space<vmem>>, vector<1x8x128xf32>
    %6 = vector.shape_cast %5 : vector<1x8x128xf32> to vector<8x128xf32>
    %c0_5 = arith.constant 0 : index
    %c0_6 = arith.constant 0 : index
    %7 = vector.load %arg3[%c0_5, %c0_6] : memref<128x128xf32, #tpu.memory_space<vmem>>, vector<128x128xf32>
    %cst = arith.constant dense<0.000000e+00> : vector<8x128xf32>
    %8 = tpu.matmul %3, %7, %cst {dimension_numbers = #tpu.dot_dimension_numbers<[1], [0], [0], [1], [0, 0, 1, 1], [], []>} : vector<8x128xf32>, vector<128x128xf32>, vector<8x128xf32> -> vector<8x128xf32>
    %9 = arith.addf %6, %8 : vector<8x128xf32>
    %10 = math.tanh %9 : vector<8x128xf32>
    %c1_i32 = arith.constant 1 : i32
    %11 = arith.index_cast %c1_i32 : i32 to index
    %c0_7 = arith.constant 0 : index
    %c0_8 = arith.constant 0 : index
    %12 = vector.load %arg2[%11, %c0_7, %c0_8] : memref<8x8x128xf32, #tpu.memory_space<vmem>>, vector<1x8x128xf32>
    %13 = vector.shape_cast %12 : vector<1x8x128xf32> to vector<8x128xf32>
    %c0_9 = arith.constant 0 : index
    %c0_10 = arith.constant 0 : index
    %14 = vector.load %arg3[%c0_9, %c0_10] : memref<128x128xf32, #tpu.memory_space<vmem>>, vector<128x128xf32>
    %cst_11 = arith.constant dense<0.000000e+00> : vector<8x128xf32>
    %15 = tpu.matmul %10, %14, %cst_11 {dimension_numbers = #tpu.dot_dimension_numbers<[1], [0], [0], [1], [0, 0, 1, 1], [], []>} : vector<8x128xf32>, vector<128x128xf32>, vector<8x128xf32> -> vector<8x128xf32>
    %16 = arith.addf %13, %15 : vector<8x128xf32>
    %17 = math.tanh %16 : vector<8x128xf32>
    %c2_i32 = arith.constant 2 : i32
    %18 = arith.index_cast %c2_i32 : i32 to index
    %c0_12 = arith.constant 0 : index
    %c0_13 = arith.constant 0 : index
    %19 = vector.load %arg2[%18, %c0_12, %c0_13] : memref<8x8x128xf32, #tpu.memory_space<vmem>>, vector<1x8x128xf32>
    %20 = vector.shape_cast %19 : vector<1x8x128xf32> to vector<8x128xf32>
    %c0_14 = arith.constant 0 : index
    %c0_15 = arith.constant 0 : index
    %21 = vector.load %arg3[%c0_14, %c0_15] : memref<128x128xf32, #tpu.memory_space<vmem>>, vector<128x128xf32>
    %cst_16 = arith.constant dense<0.000000e+00> : vector<8x128xf32>
    %22 = tpu.matmul %17, %21, %cst_16 {dimension_numbers = #tpu.dot_dimension_numbers<[1], [0], [0], [1], [0, 0, 1, 1], [], []>} : vector<8x128xf32>, vector<128x128xf32>, vector<8x128xf32> -> vector<8x128xf32>
    %23 = arith.addf %20, %22 : vector<8x128xf32>
    %24 = math.tanh %23 : vector<8x128xf32>
    %c3_i32 = arith.constant 3 : i32
    %25 = arith.index_cast %c3_i32 : i32 to index
    %c0_17 = arith.constant 0 : index
    %c0_18 = arith.constant 0 : index
    %26 = vector.load %arg2[%25, %c0_17, %c0_18] : memref<8x8x128xf32, #tpu.memory_space<vmem>>, vector<1x8x128xf32>
    %27 = vector.shape_cast %26 : vector<1x8x128xf32> to vector<8x128xf32>
    %c0_19 = arith.constant 0 : index
    %c0_20 = arith.constant 0 : index
    %28 = vector.load %arg3[%c0_19, %c0_20] : memref<128x128xf32, #tpu.memory_space<vmem>>, vector<128x128xf32>
    %cst_21 = arith.constant dense<0.000000e+00> : vector<8x128xf32>
    %29 = tpu.matmul %24, %28, %cst_21 {dimension_numbers = #tpu.dot_dimension_numbers<[1], [0], [0], [1], [0, 0, 1, 1], [], []>} : vector<8x128xf32>, vector<128x128xf32>, vector<8x128xf32> -> vector<8x128xf32>
    %30 = arith.addf %27, %29 : vector<8x128xf32>
    %31 = math.tanh %30 : vector<8x128xf32>
    %c4_i32 = arith.constant 4 : i32
    %32 = arith.index_cast %c4_i32 : i32 to index
    %c0_22 = arith.constant 0 : index
    %c0_23 = arith.constant 0 : index
    %33 = vector.load %arg2[%32, %c0_22, %c0_23] : memref<8x8x128xf32, #tpu.memory_space<vmem>>, vector<1x8x128xf32>
    %34 = vector.shape_cast %33 : vector<1x8x128xf32> to vector<8x128xf32>
    %c0_24 = arith.constant 0 : index
    %c0_25 = arith.constant 0 : index
    %35 = vector.load %arg3[%c0_24, %c0_25] : memref<128x128xf32, #tpu.memory_space<vmem>>, vector<128x128xf32>
    %cst_26 = arith.constant dense<0.000000e+00> : vector<8x128xf32>
    %36 = tpu.matmul %31, %35, %cst_26 {dimension_numbers = #tpu.dot_dimension_numbers<[1], [0], [0], [1], [0, 0, 1, 1], [], []>} : vector<8x128xf32>, vector<128x128xf32>, vector<8x128xf32> -> vector<8x128xf32>
    %37 = arith.addf %34, %36 : vector<8x128xf32>
    %38 = math.tanh %37 : vector<8x128xf32>
    %c5_i32 = arith.constant 5 : i32
    %39 = arith.index_cast %c5_i32 : i32 to index
    %c0_27 = arith.constant 0 : index
    %c0_28 = arith.constant 0 : index
    %40 = vector.load %arg2[%39, %c0_27, %c0_28] : memref<8x8x128xf32, #tpu.memory_space<vmem>>, vector<1x8x128xf32>
    %41 = vector.shape_cast %40 : vector<1x8x128xf32> to vector<8x128xf32>
    %c0_29 = arith.constant 0 : index
    %c0_30 = arith.constant 0 : index
    %42 = vector.load %arg3[%c0_29, %c0_30] : memref<128x128xf32, #tpu.memory_space<vmem>>, vector<128x128xf32>
    %cst_31 = arith.constant dense<0.000000e+00> : vector<8x128xf32>
    %43 = tpu.matmul %38, %42, %cst_31 {dimension_numbers = #tpu.dot_dimension_numbers<[1], [0], [0], [1], [0, 0, 1, 1], [], []>} : vector<8x128xf32>, vector<128x128xf32>, vector<8x128xf32> -> vector<8x128xf32>
    %44 = arith.addf %41, %43 : vector<8x128xf32>
    %45 = math.tanh %44 : vector<8x128xf32>
    %c6_i32 = arith.constant 6 : i32
    %46 = arith.index_cast %c6_i32 : i32 to index
    %c0_32 = arith.constant 0 : index
    %c0_33 = arith.constant 0 : index
    %47 = vector.load %arg2[%46, %c0_32, %c0_33] : memref<8x8x128xf32, #tpu.memory_space<vmem>>, vector<1x8x128xf32>
    %48 = vector.shape_cast %47 : vector<1x8x128xf32> to vector<8x128xf32>
    %c0_34 = arith.constant 0 : index
    %c0_35 = arith.constant 0 : index
    %49 = vector.load %arg3[%c0_34, %c0_35] : memref<128x128xf32, #tpu.memory_space<vmem>>, vector<128x128xf32>
    %cst_36 = arith.constant dense<0.000000e+00> : vector<8x128xf32>
    %50 = tpu.matmul %45, %49, %cst_36 {dimension_numbers = #tpu.dot_dimension_numbers<[1], [0], [0], [1], [0, 0, 1, 1], [], []>} : vector<8x128xf32>, vector<128x128xf32>, vector<8x128xf32> -> vector<8x128xf32>
    %51 = arith.addf %48, %50 : vector<8x128xf32>
    %52 = math.tanh %51 : vector<8x128xf32>
    %c7_i32 = arith.constant 7 : i32
    %53 = arith.index_cast %c7_i32 : i32 to index
    %c0_37 = arith.constant 0 : index
    %c0_38 = arith.constant 0 : index
    %54 = vector.load %arg2[%53, %c0_37, %c0_38] : memref<8x8x128xf32, #tpu.memory_space<vmem>>, vector<1x8x128xf32>
    %55 = vector.shape_cast %54 : vector<1x8x128xf32> to vector<8x128xf32>
    %c0_39 = arith.constant 0 : index
    %c0_40 = arith.constant 0 : index
    %56 = vector.load %arg3[%c0_39, %c0_40] : memref<128x128xf32, #tpu.memory_space<vmem>>, vector<128x128xf32>
    %cst_41 = arith.constant dense<0.000000e+00> : vector<8x128xf32>
    %57 = tpu.matmul %52, %56, %cst_41 {dimension_numbers = #tpu.dot_dimension_numbers<[1], [0], [0], [1], [0, 0, 1, 1], [], []>} : vector<8x128xf32>, vector<128x128xf32>, vector<8x128xf32> -> vector<8x128xf32>
    %58 = arith.addf %55, %57 : vector<8x128xf32>
    %59 = math.tanh %58 : vector<8x128xf32>
    %c8_i32 = arith.constant 8 : i32
    %c0_42 = arith.constant 0 : index
    %c0_43 = arith.constant 0 : index
    %60 = vector.load %arg6[%c0_42, %c0_43] : memref<8x128xf32, #tpu.memory_space<vmem>>, vector<8x128xf32>
    tpu.vector_store %arg6[%c0_42, %c0_43], %59 {strides = array<i32>} : memref<8x128xf32, #tpu.memory_space<vmem>>, vector<8x128xf32>,
    %c0_i32_44 = arith.constant 0 : i32
    %61 = arith.cmpi eq, %arg1, %c0_i32_44 : i32
    %62 = arith.extui %61 : i1 to i32
    %c0_i32_45 = arith.constant 0 : i32
    %63 = arith.cmpi ne, %62, %c0_i32_45 : i32
    scf.if %63 {
      %c0_46 = arith.constant 0 : index
      %c0_47 = arith.constant 0 : index
      %64 = vector.load %arg5[%c0_46, %c0_47] : memref<8x128xf32, #tpu.memory_space<vmem>>, vector<8x128xf32>
      tpu.vector_store %arg5[%c0_46, %c0_47], %59 {strides = array<i32>} : memref<8x128xf32, #tpu.memory_space<vmem>>, vector<8x128xf32>,
    } else {
    }
    return
  }
  func.func @transform_0(%arg0: i32, %arg1: i32) -> (i32, i32, i32) {
    %c0_i32 = arith.constant 0 : i32
    %c0_i32_0 = arith.constant 0 : i32
    return %arg1, %arg0, %c0_i32 : i32, i32, i32
  }
  func.func @transform_1(%arg0: i32, %arg1: i32) -> (i32, i32) {
    %c0_i32 = arith.constant 0 : i32
    %c0_i32_0 = arith.constant 0 : i32
    %c0_i32_1 = arith.constant 0 : i32
    return %c0_i32, %c0_i32_0 : i32, i32
  }
  func.func @transform_2(%arg0: i32, %arg1: i32) -> (i32, i32) {
    %c0_i32 = arith.constant 0 : i32
    %c0_i32_0 = arith.constant 0 : i32
    return %arg0, %c0_i32 : i32, i32
  }
  func.func @transform_3(%arg0: i32, %arg1: i32) -> (i32, i32) {
    %c0_i32 = arith.constant 0 : i32
    %c0_i32_0 = arith.constant 0 : i32
    return %arg0, %c0_i32 : i32, i32
  }
}

</mosaic_0001>

<llo_original>
// kernel: tpu_custom_call.1
$region0: #{tpu_custom_call.1}
  #allocation0 [shape = 'u32[]', space=smem, size = 0x4, offset = 0x4, fixed_abs, tag = 'smem constant byte address 0x4 - core index']
  #allocation1 [shape = 'u32[72,128]{1,0:T(1,128)}', space=vmem, size = 0x9000, scoped, tag = 'internal scratch']
  #allocation2 [shape = 'f32[8,128]{1,0:T(8,128)}', space=vmem, size = 0x1000, scoped, tag = 'scratch operand']
  %s0 = inlined_call_operand.hbm [shape: f32[8,8,128], index: 0, kind: input, shape index: {}]
  %s1 = inlined_call_operand.hbm [shape: f32[128,128], index: 1, kind: input, shape index: {}]
  %s2 = inlined_call_operand.hbm [shape: f32[8,128], index: 2, kind: input, shape index: {}]
  %s3 = inlined_call_operand.hbm [shape: f32[8,128], index: 3, kind: output, shape index: {}]
  %s4 = sld [smem:[#allocation0]]
  $region42: #{tpu_custom_call.1} parent=0
    _
  %s6 = ssub.s32 1, %s4
  %s7 = scalar_select 0, %s6, %s4
  $region1: #{tpu_custom_call.1} parent=0
    #allocation3 [shape = 'u8[32768]{0}', space=vmem, size = 0x8000, scoped, tag = 'input window, operand 0, single buffered']
    #allocation4 [shape = 's32[1]{0}', space=sflag, size = 0x4, scoped, tag = 'scoped memory for tpu_custom_call.1']
    #allocation5 [shape = 's32[1]{0}', space=sflag, size = 0x4, scoped, tag = 'scoped memory for tpu_custom_call.1']
    #allocation6 [shape = 'u8[65536]{0}', space=vmem, size = 0x10000, scoped, tag = 'input window, operand 1, single buffered']
    #allocation7 [shape = 's32[1]{0}', space=sflag, size = 0x4, scoped, tag = 'scoped memory for tpu_custom_call.1']
    #allocation8 [shape = 'u8[4096]{0}', space=vmem, size = 0x1000, scoped, tag = 'input window, operand 2, single buffered']
    #allocation9 [shape = 'u8[4096]{0}', space=vmem, size = 0x1000, scoped, tag = 'output window, operand 0, single buffered']
    %8 = vsyncpa [#allocation4], 0
    %9 = vsyncpa [#allocation7], 0
    %10 = vsyncpa [#allocation5], 0
    // Predicated region
    $region2: #{tpu_custom_call.1} parent=1 // pred_check
      _
    $region3: #{tpu_custom_call.1} parent=1 // pred_check_branch
      %12 = sbr.rel (0) target = $region5
    $region4: #{tpu_custom_call.1} parent=1 // pred_region
      %14 = vsyncadd [#allocation4], 0
      %s15 = sshll.u32 %s0, 4
      %s16 = int_to_ptr.hbm [resolvable:$true] %s15
      %s17 = sshll.u32 [#allocation3], 4
      %s18 = int_to_ptr.vmem [resolvable:$true] %s17
      %23 = dma.hbm_to_vmem [thread:$0]  %s16, 1024, %s18, [#allocation4], 128, 128, 8
    $region5: #{tpu_custom_call.1} parent=1 // pred_fallthru
      _
    // Predicated region
    $region6: #{tpu_custom_call.1} parent=1 // pred_check
      _
    $region7: #{tpu_custom_call.1} parent=1 // pred_check_branch
      %25 = sbr.rel (0) target = $region9
    $region8: #{tpu_custom_call.1} parent=1 // pred_region
      %27 = vsyncadd [#allocation7], 0
      %s28 = sshll.u32 %s1, 4
      %s29 = int_to_ptr.hbm [resolvable:$true] %s28
      %s30 = sshll.u32 [#allocation6], 4
      %s31 = int_to_ptr.vmem [resolvable:$true] %s30
      %36 = dma.hbm_to_vmem [thread:$0]  %s29, 2048, %s31, [#allocation7], 128, 128, 8
    $region9: #{tpu_custom_call.1} parent=1 // pred_fallthru
      _
    // Predicated region
    $region10: #{tpu_custom_call.1} parent=1 // pred_check
      _
    $region11: #{tpu_custom_call.1} parent=1 // pred_check_branch
      %38 = sbr.rel (0) target = $region13
    $region12: #{tpu_custom_call.1} parent=1 // pred_region
      %40 = vsyncadd [#allocation7], 0
      %s42 = sshll.u32 %s2, 4
      %s43 = int_to_ptr.hbm [resolvable:$true] %s42
      %s44 = sshll.u32 [#allocation8], 4
      %s45 = int_to_ptr.vmem [resolvable:$true] %s44
      %47 = dma.hbm_to_vmem [thread:$0]  %s43, 128, %s45, [#allocation7]
    $region13: #{tpu_custom_call.1} parent=1 // pred_fallthru
      _
    // Predicated region
    $region14: #{tpu_custom_call.1} parent=1 // pred_check
      _
    $region15: #{tpu_custom_call.1} parent=1 // pred_check_branch
      %49 = sbr.rel (0) target = $region17
    $region16: #{tpu_custom_call.1} parent=1 // pred_region
      %51 = dma.done [#allocation4], 1024
    $region17: #{tpu_custom_call.1} parent=1 // pred_fallthru
      _
    // Predicated region
    $region18: #{tpu_custom_call.1} parent=1 // pred_check
      _
    $region19: #{tpu_custom_call.1} parent=1 // pred_check_branch
      %53 = sbr.rel (0) target = $region21
    $region20: #{tpu_custom_call.1} parent=1 // pred_region
      %55 = dma.done [#allocation7], 2048
    $region21: #{tpu_custom_call.1} parent=1 // pred_fallthru
      _
    // Predicated region
    $region22: #{tpu_custom_call.1} parent=1 // pred_check
      _
    $region23: #{tpu_custom_call.1} parent=1 // pred_check_branch
      %57 = sbr.rel (0) target = $region25
    $region24: #{tpu_custom_call.1} parent=1 // pred_region
      %59 = dma.done [#allocation7], 128
    $region25: #{tpu_custom_call.1} parent=1 // pred_fallthru
      _
    %p60 = scmp.eq.s32.totalorder 0, 0
    // Predicated region
    $region26: #{tpu_custom_call.1} parent=1 // pred_check
      %p61 = pneg %p60
    $region27: #{tpu_custom_call.1} parent=1 // pred_check_branch
      %63 = sbr.rel (%p61) target = $region29
    $region28: #{tpu_custom_call.1} parent=1 // pred_region
      %v64 = vld [vmem:[#allocation8] sm:$0xff]
      %65 = vst [vmem:[#allocation2] sm:$0xff] %v64
    $region29: #{tpu_custom_call.1} parent=1 // pred_fallthru
      _
    %v66 = vld [vmem:[#allocation2] sm:$0xff]
    %v67 = vld [vmem:[#allocation3] sm:$0xff]
    %v68 = vld [vmem:[#allocation6] sm:$0xff]
    %v69 = vld [vmem:[#allocation6 + $0x8] sm:$0xff]
    %v70 = vld [vmem:[#allocation6 + $0x10] sm:$0xff]
    %v71 = vld [vmem:[#allocation6 + $0x18] sm:$0xff]
    %v72 = vld [vmem:[#allocation6 + $0x20] sm:$0xff]
    %v73 = vld [vmem:[#allocation6 + $0x28] sm:$0xff]
    %v74 = vld [vmem:[#allocation6 + $0x30] sm:$0xff]
    %v75 = vld [vmem:[#allocation6 + $0x38] sm:$0xff]
    %v76 = vld [vmem:[#allocation6 + $0x40] sm:$0xff]
    %v77 = vld [vmem:[#allocation6 + $0x48] sm:$0xff]
    %v78 = vld [vmem:[#allocation6 + $0x50] sm:$0xff]
    %v79 = vld [vmem:[#allocation6 + $0x58] sm:$0xff]
    %v80 = vld [vmem:[#allocation6 + $0x60] sm:$0xff]
    %v81 = vld [vmem:[#allocation6 + $0x68] sm:$0xff]
    %v82 = vld [vmem:[#allocation6 + $0x70] sm:$0xff]
    %v83 = vld [vmem:[#allocation6 + $0x78] sm:$0xff]
    %84 = vmatpush.msra.mxu0 %v83
    %85 = vmatpush.msra.mxu0 %v82
    %86 = vmatpush.msra.mxu0 %v81
    %87 = vmatpush.msra.mxu0 %v80
    %88 = vmatpush.msra.mxu0 %v79
    %89 = vmatpush.msra.mxu0 %v78
    %90 = vmatpush.msra.mxu0 %v77
    %91 = vmatpush.msra.mxu0 %v76
    %92 = vmatpush.msra.mxu0 %v75
    %93 = vmatpush.msra.mxu0 %v74
    %94 = vmatpush.msra.mxu0 %v73
    %95 = vmatpush.msra.mxu0 %v72
    %96 = vmatpush.msra.mxu0 %v71
    %97 = vmatpush.msra.mxu0 %v70
    %98 = vmatpush.msra.mxu0 %v69
    %99 = vmatpush.msra.mxu0 %v68
    %100 = vmatmul.f32.gmra.mxu0 %v66
    %v101 = vpop.f32.mrf.mxu0
    %v102 = vadd.f32 0.0, %v101
    %103 = vdwg.mxu0
    %v104 = vadd.f32 %v67, %v102
    %v105 = vtanh.pop %v104
    %s106 = scalar_lea.vmem [#allocation3], 8
    %v107 = vld [vmem:[%s106] sm:$0xff]
    %108 = vmatpush.msra.mxu0 %v83
    %109 = vmatpush.msra.mxu0 %v82
    %110 = vmatpush.msra.mxu0 %v81
    %111 = vmatpush.msra.mxu0 %v80
    %112 = vmatpush.msra.mxu0 %v79
    %113 = vmatpush.msra.mxu0 %v78
    %114 = vmatpush.msra.mxu0 %v77
    %115 = vmatpush.msra.mxu0 %v76
    %116 = vmatpush.msra.mxu0 %v75
    %117 = vmatpush.msra.mxu0 %v74
    %118 = vmatpush.msra.mxu0 %v73
    %119 = vmatpush.msra.mxu0 %v72
    %120 = vmatpush.msra.mxu0 %v71
    %121 = vmatpush.msra.mxu0 %v70
    %122 = vmatpush.msra.mxu0 %v69
    %123 = vmatpush.msra.mxu0 %v68
    %124 = vmatmul.f32.gmra.mxu0 %v105
    %v125 = vpop.f32.mrf.mxu0
    %v126 = vadd.f32 0.0, %v125
    %127 = vdwg.mxu0
    %v128 = vadd.f32 %v107, %v126
    %v129 = vtanh.pop %v128
    %s130 = scalar_lea.vmem [#allocation3], 16
    %v131 = vld [vmem:[%s130] sm:$0xff]
    %132 = vmatpush.msra.mxu0 %v83
    %133 = vmatpush.msra.mxu0 %v82
    %134 = vmatpush.msra.mxu0 %v81
    %135 = vmatpush.msra.mxu0 %v80
    %136 = vmatpush.msra.mxu0 %v79
    %137 = vmatpush.msra.mxu0 %v78
    %138 = vmatpush.msra.mxu0 %v77
    %139 = vmatpush.msra.mxu0 %v76
    %140 = vmatpush.msra.mxu0 %v75
    %141 = vmatpush.msra.mxu0 %v74
    %142 = vmatpush.msra.mxu0 %v73
    %143 = vmatpush.msra.mxu0 %v72
    %144 = vmatpush.msra.mxu0 %v71
    %145 = vmatpush.msra.mxu0 %v70
    %146 = vmatpush.msra.mxu0 %v69
    %147 = vmatpush.msra.mxu0 %v68
    %148 = vmatmul.f32.gmra.mxu0 %v129
    %v149 = vpop.f32.mrf.mxu0
    %v150 = vadd.f32 0.0, %v149
    %151 = vdwg.mxu0
    %v152 = vadd.f32 %v131, %v150
    %v153 = vtanh.pop %v152
    %s154 = scalar_lea.vmem [#allocation3], 24
    %v155 = vld [vmem:[%s154] sm:$0xff]
    %156 = vmatpush.msra.mxu0 %v83
    %157 = vmatpush.msra.mxu0 %v82
    %158 = vmatpush.msra.mxu0 %v81
    %159 = vmatpush.msra.mxu0 %v80
    %160 = vmatpush.msra.mxu0 %v79
    %161 = vmatpush.msra.mxu0 %v78
    %162 = vmatpush.msra.mxu0 %v77
    %163 = vmatpush.msra.mxu0 %v76
    %164 = vmatpush.msra.mxu0 %v75
    %165 = vmatpush.msra.mxu0 %v74
    %166 = vmatpush.msra.mxu0 %v73
    %167 = vmatpush.msra.mxu0 %v72
    %168 = vmatpush.msra.mxu0 %v71
    %169 = vmatpush.msra.mxu0 %v70
    %170 = vmatpush.msra.mxu0 %v69
    %171 = vmatpush.msra.mxu0 %v68
    %172 = vmatmul.f32.gmra.mxu0 %v153
    %v173 = vpop.f32.mrf.mxu0
    %v174 = vadd.f32 0.0, %v173
    %175 = vdwg.mxu0
    %v176 = vadd.f32 %v155, %v174
    %v177 = vtanh.pop %v176
    %s178 = scalar_lea.vmem [#allocation3], 32
    %v179 = vld [vmem:[%s178] sm:$0xff]
    %180 = vmatpush.msra.mxu0 %v83
    %181 = vmatpush.msra.mxu0 %v82
    %182 = vmatpush.msra.mxu0 %v81
    %183 = vmatpush.msra.mxu0 %v80
    %184 = vmatpush.msra.mxu0 %v79
    %185 = vmatpush.msra.mxu0 %v78
    %186 = vmatpush.msra.mxu0 %v77
    %187 = vmatpush.msra.mxu0 %v76
    %188 = vmatpush.msra.mxu0 %v75
    %189 = vmatpush.msra.mxu0 %v74
    %190 = vmatpush.msra.mxu0 %v73
    %191 = vmatpush.msra.mxu0 %v72
    %192 = vmatpush.msra.mxu0 %v71
    %193 = vmatpush.msra.mxu0 %v70
    %194 = vmatpush.msra.mxu0 %v69
    %195 = vmatpush.msra.mxu0 %v68
    %196 = vmatmul.f32.gmra.mxu0 %v177
    %v197 = vpop.f32.mrf.mxu0
    %v198 = vadd.f32 0.0, %v197
    %199 = vdwg.mxu0
    %v200 = vadd.f32 %v179, %v198
    %v201 = vtanh.pop %v200
    %s202 = scalar_lea.vmem [#allocation3], 40
    %v203 = vld [vmem:[%s202] sm:$0xff]
    %204 = vmatpush.msra.mxu0 %v83
    %205 = vmatpush.msra.mxu0 %v82
    %206 = vmatpush.msra.mxu0 %v81
    %207 = vmatpush.msra.mxu0 %v80
    %208 = vmatpush.msra.mxu0 %v79
    %209 = vmatpush.msra.mxu0 %v78
    %210 = vmatpush.msra.mxu0 %v77
    %211 = vmatpush.msra.mxu0 %v76
    %212 = vmatpush.msra.mxu0 %v75
    %213 = vmatpush.msra.mxu0 %v74
    %214 = vmatpush.msra.mxu0 %v73
    %215 = vmatpush.msra.mxu0 %v72
    %216 = vmatpush.msra.mxu0 %v71
    %217 = vmatpush.msra.mxu0 %v70
    %218 = vmatpush.msra.mxu0 %v69
    %219 = vmatpush.msra.mxu0 %v68
    %220 = vmatmul.f32.gmra.mxu0 %v201
    %v221 = vpop.f32.mrf.mxu0
    %v222 = vadd.f32 0.0, %v221
    %223 = vdwg.mxu0
    %v224 = vadd.f32 %v203, %v222
    %v225 = vtanh.pop %v224
    %s226 = scalar_lea.vmem [#allocation3], 48
    %v227 = vld [vmem:[%s226] sm:$0xff]
    %228 = vmatpush.msra.mxu0 %v83
    %229 = vmatpush.msra.mxu0 %v82
    %230 = vmatpush.msra.mxu0 %v81
    %231 = vmatpush.msra.mxu0 %v80
    %232 = vmatpush.msra.mxu0 %v79
    %233 = vmatpush.msra.mxu0 %v78
    %234 = vmatpush.msra.mxu0 %v77
    %235 = vmatpush.msra.mxu0 %v76
    %236 = vmatpush.msra.mxu0 %v75
    %237 = vmatpush.msra.mxu0 %v74
    %238 = vmatpush.msra.mxu0 %v73
    %239 = vmatpush.msra.mxu0 %v72
    %240 = vmatpush.msra.mxu0 %v71
    %241 = vmatpush.msra.mxu0 %v70
    %242 = vmatpush.msra.mxu0 %v69
    %243 = vmatpush.msra.mxu0 %v68
    %244 = vmatmul.f32.gmra.mxu0 %v225
    %v245 = vpop.f32.mrf.mxu0
    %v246 = vadd.f32 0.0, %v245
    %247 = vdwg.mxu0
    %v248 = vadd.f32 %v227, %v246
    %v249 = vtanh.pop %v248
    %s250 = scalar_lea.vmem [#allocation3], 56
    %v251 = vld [vmem:[%s250] sm:$0xff]
    %252 = vmatpush.msra.mxu0 %v83
    %253 = vmatpush.msra.mxu0 %v82
    %254 = vmatpush.msra.mxu0 %v81
    %255 = vmatpush.msra.mxu0 %v80
    %256 = vmatpush.msra.mxu0 %v79
    %257 = vmatpush.msra.mxu0 %v78
    %258 = vmatpush.msra.mxu0 %v77
    %259 = vmatpush.msra.mxu0 %v76
    %260 = vmatpush.msra.mxu0 %v75
    %261 = vmatpush.msra.mxu0 %v74
    %262 = vmatpush.msra.mxu0 %v73
    %263 = vmatpush.msra.mxu0 %v72
    %264 = vmatpush.msra.mxu0 %v71
    %265 = vmatpush.msra.mxu0 %v70
    %266 = vmatpush.msra.mxu0 %v69
    %267 = vmatpush.msra.mxu0 %v68
    %268 = vmatmul.f32.gmra.mxu0 %v249
    %v269 = vpop.f32.mrf.mxu0
    %v270 = vadd.f32 0.0, %v269
    %271 = vdwg.mxu0
    %v272 = vadd.f32 %v251, %v270
    %v273 = vtanh.pop %v272
    %274 = vst [vmem:[#allocation2] sm:$0xff] %v273
    // Predicated region
    $region30: #{tpu_custom_call.1} parent=1 // pred_check
      %p275 = pneg %p60
    $region31: #{tpu_custom_call.1} parent=1 // pred_check_branch
      %277 = sbr.rel (%p275) target = $region33
    $region32: #{tpu_custom_call.1} parent=1 // pred_region
      %278 = vst [vmem:[#allocation9] sm:$0xff] %v273
    $region33: #{tpu_custom_call.1} parent=1 // pred_fallthru
      _
    // Predicated region
    $region34: #{tpu_custom_call.1} parent=1 // pred_check
      _
    $region35: #{tpu_custom_call.1} parent=1 // pred_check_branch
      %280 = sbr.rel (0) target = $region37
    $region36: #{tpu_custom_call.1} parent=1 // pred_region
      %282 = vsyncadd [#allocation5], 0
      %s284 = sshll.u32 [#allocation9], 4
      %s285 = int_to_ptr.vmem [resolvable:$true] %s284
      %s286 = sshll.u32 %s3, 4
      %s287 = int_to_ptr.hbm [resolvable:$true] %s286
      %289 = dma.vmem_to_hbm [thread:$0]  %s285, 128, %s287, [#allocation5]
    $region37: #{tpu_custom_call.1} parent=1 // pred_fallthru
      _
    // Predicated region
    $region38: #{tpu_custom_call.1} parent=1 // pred_check
      _
    $region39: #{tpu_custom_call.1} parent=1 // pred_check_branch
      %291 = sbr.rel (0) target = $region41
    $region40: #{tpu_custom_call.1} parent=1 // pred_region
      %293 = dma.done [#allocation5], 128
    $region41: #{tpu_custom_call.1} parent=1 // pred_fallthru
      _
    %294 = vsyncpa [#allocation4], 1
    %295 = vsyncpa [#allocation7], 1
    %296 = vsyncpa [#allocation5], 1

</llo_original>
